<compile_context>
chip_gen: v7x
topology: tpu7x:2x2x1
jax: 0.10.0
libtpu: 0.0.40
codegen_flags: <defaults>
</compile_context>

<pallas_src>
import math
import functools

import numpy as np
import jax
import jax.numpy as jnp
from jax.experimental import pallas as pl
from jax.experimental.pallas import tpu as pltpu

_LANE = 128
_SUBLANE = 8


def _beta_binomial_prior(causal_n: int, alpha: float, beta: float) -> np.ndarray:
    """Same construction as PriorFilter.__init__ (the `prior_filter` buffer)."""
    g = math.gamma

    def beta_func(x, y):
        return g(x) * g(y) / g(x + y)

    def p(n, k, a, b):
        f = math.factorial
        ncr = f(n) / (f(k) * f(n - k))
        return ncr * beta_func(k + a, n - k + b) / beta_func(a, b)

    prior = np.array(
        [p(causal_n - 1, i, alpha, beta) for i in range(causal_n)[::-1]],
        dtype=np.float32,
    )
    return prior  # conv filter taps, exactly as in the torch module


def _prior_filter_kernel(x_ref, h_ref, o_ref, *, coeffs):
    """One (TB, TT) output block of the causal FIR + log-clamp.

    x_ref: (TB, TT)  current T chunk of prev_attn (f32, zero right-padding).
    h_ref: (TB, 128) the 128 columns immediately preceding this chunk (halo).
           For chunk 0 the BlockSpec clamps to block 0, so it is zeroed below
           (reproduces F.pad's causal left zero-padding).
    o_ref: (TB, TT)  log(clamp(FIR(x), 1e-5)).
    """
    x = x_ref[...]
    tt = x.shape[-1]

    acc = x * jnp.float32(coeffs[0])  # k = 0 tap: no shift needed
    if len(coeffs) > 1:
        j = pl.program_id(1)
        h = h_ref[...] * (j > 0).astype(jnp.float32)  # zero the halo for chunk 0
        # xe[:, 128 + t] == x[:, t]; xe[:, 128 + t - k] is x shifted right by k
        # lanes with the previous chunk (or zeros) filling the first k lanes.
        xe = jnp.concatenate([h, x], axis=1)          # (TB, 128 + TT)
        for k in range(1, len(coeffs)):               # causal_n small: static unroll
            acc = acc + jnp.float32(coeffs[k]) * xe[:, 128 - k: 128 - k + tt]

    # log(clamp(., 1e-5)) — EUP, effectively free in a mem-bound kernel.
    o_ref[...] = jnp.log(jnp.maximum(acc, jnp.float32(1e-5))).astype(o_ref.dtype)


def _pick_tiles(B: int, T: int, *, target_block_bytes: int = 2 * 1024 * 1024):
    """Choose (TB, TT, n_t_chunks), lane/sublane aligned, ~target_block_bytes
    per block, with >= 2 grid steps whenever the problem allows (pipelining +
    v7x megacore), and a pipelined footprint safe under v5e's 16 MiB default."""
    cdiv = lambda a, b: -(-a // b)
    t128 = max(_LANE, cdiv(T, _LANE) * _LANE)
    n_lane_tiles = t128 // _LANE
    target_elems = max(target_block_bytes // 4, _SUBLANE * _LANE)

    # Batch tile: full batch if B <= 8 (block dim == full dim is legal),
    # otherwise a multiple of 8 sized so a full-T row block is near the target.
    if B <= _SUBLANE:
        tb = B
    else:
        full_row_rows = max(_SUBLANE, (target_elems // t128) // _SUBLANE * _SUBLANE)
        tb = min((B // _SUBLANE) * _SUBLANE, full_row_rows)
    n_b = cdiv(B, tb)

    # Single-step batch grid but batch is splittable and T is not -> split batch.
    if n_b < 2 and n_lane_tiles < 2 and B >= 2 * _SUBLANE:
        tb = max(_SUBLANE, (tb // 2) // _SUBLANE * _SUBLANE)
        n_b = cdiv(B, tb)

    # T tile: multiple-of-128 chunks near the target; force >= 2 chunks when the
    # batch axis alone would give a single grid step (small-B / long-T case).
    tt_tiles = max(1, min(n_lane_tiles, (target_elems // max(tb, 1)) // _LANE))
    if n_b < 2 and n_lane_tiles >= 2:
        tt_tiles = min(tt_tiles, cdiv(n_lane_tiles, 2))
    n_t = cdiv(n_lane_tiles, tt_tiles)
    tt_tiles = cdiv(n_lane_tiles, n_t)  # equalize chunk widths (all blocks full)
    return tb, tt_tiles * _LANE, n_t


def prior_filter(prev_attn: jax.Array, causal_n: int, alpha: float, beta: float,
                 *, out_dtype=jnp.float32,
                 target_block_bytes: int = 2 * 1024 * 1024):
    """Pallas implementation of PriorFilter.forward.  prev_attn: (B, T)."""
    if prev_attn.ndim != 2:
        raise ValueError("prev_attn must be (B, T)")
    if not (1 <= causal_n <= 128):
        raise ValueError("causal_n must be in [1, 128] (halo is one lane tile)")

    prior = _beta_binomial_prior(causal_n, alpha, beta)
    # prior[i] is conv tap i; lag-k coefficient = prior[causal_n-1-k].
    coeffs = tuple(float(v) for v in prior[::-1])

    x = prev_attn.astype(jnp.float32)
    B, T = x.shape

    tb, tt, n_t = _pick_tiles(B, T, target_block_bytes=target_block_bytes)
    t_total = tt * n_t
    if t_total != T:
        # Lane-dense, full chunks: unmasked stores, no garbage wrapping into
        # valid lanes from partial T blocks.  Sliced back below.
        x = jnp.pad(x, ((0, 0), (0, t_total - T)))

    n_b = pl.cdiv(B, tb)
    bpc = tt // _LANE  # 128-wide blocks per T chunk (for the halo index map)

    kernel = functools.partial(_prior_filter_kernel, coeffs=coeffs)

    out = pl.pallas_call(
        kernel,
        out_shape=jax.ShapeDtypeStruct((B, t_total), out_dtype),
        grid=(n_b, n_t),
        in_specs=[
            # Current chunk.
            pl.BlockSpec((tb, tt), lambda i, j: (i, j)),
            # Halo: the 128 columns immediately preceding the chunk (same array,
            # overlapping read); clamped to block 0 for j == 0 and zeroed in-kernel.
            pl.BlockSpec((tb, _LANE),
                         lambda i, j: (i, jnp.maximum(j * bpc - 1, 0))),
        ],
        out_specs=pl.BlockSpec((tb, tt), lambda i, j: (i, j)),
        compiler_params=pltpu.CompilerParams(
            dimension_semantics=("parallel", "parallel"),
            vmem_limit_bytes=32 * 1024 * 1024,  # blocks sized for ~<=12 MiB use
        ),
        cost_estimate=pl.CostEstimate(
            flops=int(2 * causal_n * B * t_total),
            transcendentals=int(B * t_total),
            bytes_accessed=int(8 * B * t_total + 4 * B * _LANE * n_t),
        ),
    )(x, x)

    if t_total != T:
        out = out[:, :T]
    return out


def _reference(prev_attn: np.ndarray, causal_n: int, alpha: float, beta: float):
    """Pure-numpy re-implementation of the torch forward, for verification."""
    prior = _beta_binomial_prior(causal_n, alpha, beta)
    B, T = prev_attn.shape
    padded = np.concatenate(
        [np.zeros((B, causal_n - 1), np.float32), prev_attn.astype(np.float32)], axis=1
    )
    out = np.zeros((B, T), np.float32)
    for t in range(T):
        out[:, t] = (padded[:, t: t + causal_n] * prior[None, :]).sum(axis=1)
    return np.log(np.maximum(out, 1e-5))


if __name__ == "__main__":
    causal_n, alpha, beta = 5, 0.1, 0.9  # typical DCA prior hyper-params
    key = jax.random.PRNGKey(0)

    # (B, T) cases: primary small case, T not a multiple of 128, partial batch
    # blocks, and a forced T-chunk split (exercises the halo path).
    test_shapes = [(2, 128), (3, 200), (12, 384), (2, 512)]
    for idx, (B, T) in enumerate(test_shapes):
        k = jax.random.fold_in(key, idx)
        logits = jax.random.normal(k, (B, T), dtype=jnp.float32)
        prev_attn = jax.nn.softmax(logits, axis=-1)  # behaves like attention weights

        out = jax.block_until_ready(prior_filter(prev_attn, causal_n, alpha, beta))

        ref = _reference(np.asarray(prev_attn), causal_n, alpha, beta)
        np.testing.assert_allclose(np.asarray(out), ref, rtol=1e-4, atol=1e-5)

    print("KERNEL_OK")
</pallas_src>

<mosaic_0001>
module attributes {stable_mosaic.version = 11 : i64} {
  func.func @_prior_filter_kernel(%arg0: i32, %arg1: i32, %arg2: memref<2x128xf32, #tpu.memory_space<vmem>>, %arg3: memref<2x128xf32, #tpu.memory_space<vmem>>, %arg4: memref<2x128xf32, #tpu.memory_space<vmem>>) attributes {dimension_semantics = [#tpu.dimension_semantics<parallel>, #tpu.dimension_semantics<parallel>], iteration_bounds = array<i64: 1, 1>, scalar_prefetch = 0 : i64, scratch_operands = 0 : i64, tpu.core_type = #tpu.core_type<tc>, window_params = [{transform_indices = @transform_0, window_bounds = array<i64: 2, 128>}, {transform_indices = @transform_1, window_bounds = array<i64: 2, 128>}, {transform_indices = @transform_2, window_bounds = array<i64: 2, 128>}]} {
    %c0 = arith.constant 0 : index
    %c0_0 = arith.constant 0 : index
    %0 = vector.load %arg2[%c0, %c0_0] : memref<2x128xf32, #tpu.memory_space<vmem>>, vector<2x128xf32>
    %cst = arith.constant 0.805837512 : f32
    %1 = vector.broadcast %cst : f32 to vector<2x128xf32>
    %2 = arith.mulf %0, %1 : vector<2x128xf32>
    %c0_1 = arith.constant 0 : index
    %c0_2 = arith.constant 0 : index
    %3 = vector.load %arg3[%c0_1, %c0_2] : memref<2x128xf32, #tpu.memory_space<vmem>>, vector<2x128xf32>
    %c0_i32 = arith.constant 0 : i32
    %4 = arith.cmpi sgt, %arg1, %c0_i32 : i32
    %5 = arith.extui %4 : i1 to i32
    %6 = arith.sitofp %5 : i32 to f32
    %7 = vector.broadcast %6 : f32 to vector<2x128xf32>
    %8 = arith.mulf %3, %7 : vector<2x128xf32>
    %9 = tpu.concatenate %8, %0 in 1 : vector<2x128xf32>, vector<2x128xf32> -> vector<2x256xf32>
    %10 = vector.extract_strided_slice %9 {offsets = [0, 127], sizes = [2, 128], strides = [1, 1]} : vector<2x256xf32> to vector<2x128xf32>
    %cst_3 = arith.constant 0.0826499983 : f32
    %11 = vector.broadcast %cst_3 : f32 to vector<2x128xf32>
    %12 = arith.mulf %11, %10 : vector<2x128xf32>
    %13 = arith.addf %2, %12 : vector<2x128xf32>
    %14 = vector.extract_strided_slice %9 {offsets = [0, 126], sizes = [2, 128], strides = [1, 1]} : vector<2x256xf32> to vector<2x128xf32>
    %cst_4 = arith.constant 4.702500e-02 : f32
    %15 = vector.broadcast %cst_4 : f32 to vector<2x128xf32>
    %16 = arith.mulf %15, %14 : vector<2x128xf32>
    %17 = arith.addf %13, %16 : vector<2x128xf32>
    %18 = vector.extract_strided_slice %9 {offsets = [0, 125], sizes = [2, 128], strides = [1, 1]} : vector<2x256xf32> to vector<2x128xf32>
    %cst_5 = arith.constant 3.465000e-02 : f32
    %19 = vector.broadcast %cst_5 : f32 to vector<2x128xf32>
    %20 = arith.mulf %19, %18 : vector<2x128xf32>
    %21 = arith.addf %17, %20 : vector<2x128xf32>
    %22 = vector.extract_strided_slice %9 {offsets = [0, 124], sizes = [2, 128], strides = [1, 1]} : vector<2x256xf32> to vector<2x128xf32>
    %cst_6 = arith.constant 2.983750e-02 : f32
    %23 = vector.broadcast %cst_6 : f32 to vector<2x128xf32>
    %24 = arith.mulf %23, %22 : vector<2x128xf32>
    %25 = arith.addf %21, %24 : vector<2x128xf32>
    %cst_7 = arith.constant 9.99999974E-6 : f32
    %26 = vector.broadcast %cst_7 : f32 to vector<2x128xf32>
    %27 = arith.maximumf %25, %26 : vector<2x128xf32>
    %28 = math.log %27 : vector<2x128xf32>
    %c0_8 = arith.constant 0 : index
    %c0_9 = arith.constant 0 : index
    %29 = vector.load %arg4[%c0_8, %c0_9] : memref<2x128xf32, #tpu.memory_space<vmem>>, vector<2x128xf32>
    tpu.vector_store %arg4[%c0_8, %c0_9], %28 {strides = array<i32>} : memref<2x128xf32, #tpu.memory_space<vmem>>, vector<2x128xf32>,
    return
  }
  func.func @transform_0(%arg0: i32, %arg1: i32) -> (i32, i32) {
    %c0_i32 = arith.constant 0 : i32
    return %arg0, %arg1 : i32, i32
  }
  func.func @transform_1(%arg0: i32, %arg1: i32) -> (i32, i32) {
    %c1_i32 = arith.constant 1 : i32
    %0 = arith.muli %arg1, %c1_i32 : i32
    %c1_i32_0 = arith.constant 1 : i32
    %1 = arith.subi %0, %c1_i32_0 : i32
    %c0_i32 = arith.constant 0 : i32
    %2 = arith.maxsi %1, %c0_i32 : i32
    %c0_i32_1 = arith.constant 0 : i32
    return %arg0, %2 : i32, i32
  }
  func.func @transform_2(%arg0: i32, %arg1: i32) -> (i32, i32) {
    %c0_i32 = arith.constant 0 : i32
    return %arg0, %arg1 : i32, i32
  }
}

</mosaic_0001>

<llo_original>
// kernel: tpu_custom_call.1
$region0: #{tpu_custom_call.1}
  #allocation0 [shape = 'u32[]', space=smem, size = 0x4, offset = 0x4, fixed_abs, tag = 'smem constant byte address 0x4 - core index']
  #allocation1 [shape = 'u32[144,128]{1,0:T(1,128)}', space=vmem, size = 0x12000, scoped, tag = 'internal scratch']
  %s0 = inlined_call_operand.hbm [shape: f32[2,128], index: 0, kind: input, shape index: {}]
  %s1 = inlined_call_operand.vmem [shape: f32[2,128], index: 1, kind: input, shape index: {}]
  %s2 = inlined_call_operand.hbm [shape: f32[2,128], index: 2, kind: output, shape index: {}]
  %s3 = sld [smem:[#allocation0]]
  $region22: #{tpu_custom_call.1} parent=0
    _
  %s5 = ssub.s32 1, %s3
  %s6 = scalar_select 0, %s5, %s3
  $region1: #{tpu_custom_call.1} parent=0
    #allocation2 [shape = 'u8[1024]{0}', space=vmem, size = 0x400, scoped, tag = 'input window, operand 0, single buffered']
    #allocation3 [shape = 's32[1]{0}', space=sflag, size = 0x4, scoped, tag = 'scoped memory for tpu_custom_call.1']
    #allocation4 [shape = 's32[1]{0}', space=sflag, size = 0x4, scoped, tag = 'scoped memory for tpu_custom_call.1']
    #allocation5 [shape = 'u8[1024]{0}', space=vmem, size = 0x400, scoped, tag = 'output window, operand 0, single buffered']
    %7 = vsyncpa [#allocation3], 0
    %8 = vsyncpa [#allocation4], 0
    // Predicated region
    $region2: #{tpu_custom_call.1} parent=1 // pred_check
      _
    $region3: #{tpu_custom_call.1} parent=1 // pred_check_branch
      %10 = sbr.rel (0) target = $region5
    $region4: #{tpu_custom_call.1} parent=1 // pred_region
      %s12 = ssub.s32 32, 32
      %13 = vsyncadd [#allocation3], %s12
      %s15 = sshll.u32 [#allocation2], 4
      %s16 = int_to_ptr.vmem [resolvable:$true] %s15
      %18 = dma.hbm_to_vmem [thread:$0]  %s0, 32, %s16, [#allocation3]
    $region5: #{tpu_custom_call.1} parent=1 // pred_fallthru
      _
    // Predicated region
    $region6: #{tpu_custom_call.1} parent=1 // pred_check
      _
    $region7: #{tpu_custom_call.1} parent=1 // pred_check_branch
      %20 = sbr.rel (0) target = $region9
    $region8: #{tpu_custom_call.1} parent=1 // pred_region
      %s21 = ssub.s32 0, 1
      %p22 = scmp.gt.s32.totalorder %s21, 0
      %s23 = scalar_select %p22, %s21, 0
      %p24 = scmp.lt.s32.totalorder %s23, 0
      %s25 = scalar_select %p24, %s23, 0
      %s26 = smul.addr %s25, 2
      %s27 = scalar_lea.vmem %s1, %s26
      %s28 = ssub.s32 0, 1
      %p29 = scmp.gt.s32.totalorder %s28, 0
      %s30 = scalar_select %p29, %s28, 0
    $region9: #{tpu_custom_call.1} parent=1 // pred_fallthru
      _
    // Predicated region
    $region10: #{tpu_custom_call.1} parent=1 // pred_check
      _
    $region11: #{tpu_custom_call.1} parent=1 // pred_check_branch
      %32 = sbr.rel (0) target = $region13
    $region12: #{tpu_custom_call.1} parent=1 // pred_region
      %33 = dma.done [#allocation3], 32
    $region13: #{tpu_custom_call.1} parent=1 // pred_fallthru
      _
    %s34 = ssub.s32 0, 1
    %p35 = scmp.gt.s32.totalorder %s34, 0
    %s36 = scalar_select %p35, %s34, 0
    %p37 = scmp.lt.s32.totalorder %s36, 0
    %s38 = scalar_select %p37, %s36, 0
    %s39 = smul.addr %s38, 2
    %s40 = scalar_lea.vmem %s1, %s39
    %s41 = ssub.s32 0, 1
    %p42 = scmp.gt.s32.totalorder %s41, 0
    %s43 = scalar_select %p42, %s41, 0
    %p44 = scmp.lt.s32.totalorder %s43, 0
    %s45 = scalar_select %p44, %s43, 0
    %s46 = smul.addr %s45, 2
    %s47 = scalar_lea.vmem %s1, %s46
    %s48 = ssub.s32 0, 1
    %p49 = scmp.gt.s32.totalorder %s48, 0
    %s50 = scalar_select %p49, %s48, 0
    %v51 = vld [vmem:[#allocation2] sm:$0x3]
    %v52 = vmul.f32 %v51, 0.8058375
    %v53 = vld [vmem:[%s47] sm:$0x3]
    %p54 = scmp.gt.s32.totalorder 0, 0
    %s55 = scalar_select %p54, 1, 0
    %s56 = scvt.s32.f32 %s55
    %v57 = vstv %s56
    %v58 = vmul.f32 %v53, %v57
    %v59 = vmul.f32 %v58, 0.08265
    %v60 = vmul.f32 %v51, 0.08265
    %63 = vrot.lane.b32.xlu0 %v59, 1
    %v64 = vpop.permute.xlu0 %63
    %65 = vrot.lane.b32.xlu0 %v60, 1
    %v66 = vpop.permute.xlu0 %65
    %vm67 = vcmask 7168
    %v68 = vsel %vm67, %v64, %v66
    %v70 = vadd.f32 %v52, %v68
    %v71 = vmul.f32 %v58, 0.047025
    %v72 = vmul.f32 %v51, 0.047025
    %75 = vrot.lane.b32.xlu0 %v71, 2
    %v76 = vpop.permute.xlu0 %75
    %77 = vrot.lane.b32.xlu0 %v72, 2
    %v78 = vpop.permute.xlu0 %77
    %vm79 = vcmask 15360
    %v80 = vsel %vm79, %v76, %v78
    %v82 = vadd.f32 %v70, %v80
    %v83 = vmul.f32 %v58, 0.03465
    %v84 = vmul.f32 %v51, 0.03465
    %87 = vrot.lane.b32.xlu0 %v83, 3
    %v88 = vpop.permute.xlu0 %87
    %89 = vrot.lane.b32.xlu0 %v84, 3
    %v90 = vpop.permute.xlu0 %89
    %vm91 = vcmask 23552
    %v92 = vsel %vm91, %v88, %v90
    %v94 = vadd.f32 %v82, %v92
    %v95 = vmul.f32 %v58, 0.0298375
    %v96 = vmul.f32 %v51, 0.0298375
    %99 = vrot.lane.b32.xlu0 %v95, 4
    %v100 = vpop.permute.xlu0 %99
    %101 = vrot.lane.b32.xlu0 %v96, 4
    %v102 = vpop.permute.xlu0 %101
    %vm103 = vcmask 31744
    %v104 = vsel %vm103, %v100, %v102
    %v106 = vadd.f32 %v94, %v104
    %v107 = vmax.f32 %v106, 1e-05
    %v108 = vlog2.pop %v107
    %v109 = vmul.f32 %v108, 0.6931472
    %110 = vst [vmem:[#allocation5] sm:$0x3] %v109
    // Predicated region
    $region14: #{tpu_custom_call.1} parent=1 // pred_check
      _
    $region15: #{tpu_custom_call.1} parent=1 // pred_check_branch
      %112 = sbr.rel (0) target = $region17
    $region16: #{tpu_custom_call.1} parent=1 // pred_region
      %s114 = ssub.s32 32, 32
      %115 = vsyncadd [#allocation4], %s114
      %s117 = sshll.u32 [#allocation5], 4
      %s118 = int_to_ptr.vmem [resolvable:$true] %s117
      %120 = dma.vmem_to_hbm [thread:$0]  %s118, 32, %s2, [#allocation4]
    $region17: #{tpu_custom_call.1} parent=1 // pred_fallthru
      _
    // Predicated region
    $region18: #{tpu_custom_call.1} parent=1 // pred_check
      _
    $region19: #{tpu_custom_call.1} parent=1 // pred_check_branch
      %122 = sbr.rel (0) target = $region21
    $region20: #{tpu_custom_call.1} parent=1 // pred_region
      %123 = dma.done [#allocation4], 32
    $region21: #{tpu_custom_call.1} parent=1 // pred_fallthru
      _
    %124 = vsyncpa [#allocation3], 1
    %125 = vsyncpa [#allocation4], 1

</llo_original>
